<compile_context>
chip_gen: v5e
topology: v5e:2x2
jax: 0.10.0
libtpu: 0.0.40
codegen_flags: <defaults>
</compile_context>

<pallas_src>
import math
import functools

import jax
import jax.numpy as jnp
import numpy as np
from jax.experimental import pallas as pl
from jax.experimental.pallas import tpu as pltpu


def _build_pe(max_seq_length: int, num_features: int) -> np.ndarray:
    """Deterministic sinusoidal table, identical to the PyTorch __init__ loop."""
    pe = np.zeros((max_seq_length, num_features), dtype=np.float32)
    for pos in range(max_seq_length):
        for i in range(0, num_features, 2):
            pe[pos, i] = math.sin(pos / 10000 ** (2 * i / num_features))
            pe[pos, i + 1] = math.cos(pos / 10000 ** ((2 * i + 1) / num_features))
    return pe


def _choose_col_tile(num_cols: int, rows: int, itemsize: int,
                     target_block_bytes: int) -> int:
    """Largest multiple-of-128 column tile that divides num_cols and keeps one
    (rows x tile) block under target_block_bytes.  Falls back to the full
    width when num_cols is not 128-aligned (block == full dim is always legal)."""
    if num_cols % 128 != 0:
        return num_cols
    padded_rows = max(8, rows)  # blocks with <8 rows still occupy 8 sublanes
    max_tc = max(128, (target_block_bytes // (padded_rows * itemsize)) // 128 * 128)
    best = 128
    tc = 128
    limit = min(num_cols, max_tc)
    while tc <= limit:
        if num_cols % tc == 0:
            best = tc
        tc += 128
    return best


def _pe_kernel(x_ref, pe_ref, o_ref, *, scale):
    # x_ref/o_ref: (B, TC); pe_ref: (1, TC) -> broadcast over batch rows.
    o_ref[...] = (x_ref[...] * scale + pe_ref[...]).astype(o_ref.dtype)


def _pe_dropout_kernel(x_ref, pe_ref, m_ref, o_ref, *, scale):
    # m_ref holds the pre-scaled keep mask: keep / (1 - p) or 0.
    y = x_ref[...] * scale + pe_ref[...]
    o_ref[...] = (y * m_ref[...]).astype(o_ref.dtype)


def positional_encoder(x, pe_table, *, dropout_p=0.1, train=False,
                       rng_key=None, target_block_bytes=2 << 20):
    """x: (B, S, F); pe_table: (max_seq, F).  Returns (B, S, F) in x.dtype."""
    B, S, F = x.shape
    assert pe_table.shape[0] >= S and pe_table.shape[1] == F

    C = S * F
    x2 = x.reshape(B, C)
    # Slice pe to the current sequence length, flatten, ship in x's dtype.
    pe2 = pe_table[:S].reshape(1, C).astype(x.dtype)

    itemsize = int(np.dtype(x.dtype).itemsize)
    TC = _choose_col_tile(C, B, itemsize, int(target_block_bytes))
    grid = (C // TC,)
    scale = float(math.sqrt(F))

    row_spec = pl.BlockSpec((B, TC), lambda j: (0, j))
    pe_spec = pl.BlockSpec((1, TC), lambda j: (0, j))

    use_dropout = bool(train) and float(dropout_p) > 0.0
    if use_dropout:
        p = float(dropout_p)
        if p >= 1.0:
            return jnp.zeros_like(x)
        if rng_key is None:
            rng_key = jax.random.PRNGKey(0)
        keep = jax.random.bernoulli(rng_key, 1.0 - p, (B, C))
        mask = keep.astype(x.dtype) * (1.0 / (1.0 - p))   # pre-scaled keep mask
        kernel = functools.partial(_pe_dropout_kernel, scale=scale)
        in_specs = [row_spec, pe_spec, row_spec]
        args = (x2, pe2, mask)
    else:
        kernel = functools.partial(_pe_kernel, scale=scale)
        in_specs = [row_spec, pe_spec]
        args = (x2, pe2)

    out2 = pl.pallas_call(
        kernel,
        out_shape=jax.ShapeDtypeStruct((B, C), x.dtype),
        grid=grid,
        in_specs=in_specs,
        out_specs=row_spec,
        compiler_params=pltpu.CompilerParams(
            dimension_semantics=("parallel",),
            vmem_limit_bytes=32 * 1024 * 1024,
        ),
    )(*args)
    return out2.reshape(B, S, F)


if __name__ == "__main__":
    B, S, F = 2, 8, 32
    MAX_SEQ = 64

    key = jax.random.PRNGKey(0)
    x = jax.random.normal(key, (B, S, F), dtype=jnp.float32)
    pe_table = jnp.asarray(_build_pe(MAX_SEQ, F))

    # Small block budget so even this tiny demo exercises a multi-step,
    # pipelined grid (C = 256 -> TC = 128 -> 2 grid steps).
    tgt_bytes = 128 * 8 * 4

    # Eval mode (dropout = identity): deterministic, check against pure-JAX ref.
    out = positional_encoder(x, pe_table, dropout_p=0.1, train=False,
                             target_block_bytes=tgt_bytes)
    out = jax.block_until_ready(out)

    ref = np.asarray(x) * np.float32(math.sqrt(F)) + np.asarray(pe_table[:S])[None, :, :]
    np.testing.assert_allclose(np.asarray(out), ref, rtol=1e-5, atol=1e-5)

    # Train mode (dropout via pre-scaled keep mask applied in-kernel): every
    # output element must be either 0 (dropped) or ref/(1-p) (kept).
    p = 0.1
    out_tr = jax.block_until_ready(
        positional_encoder(x, pe_table, dropout_p=p, train=True,
                           rng_key=jax.random.PRNGKey(42),
                           target_block_bytes=tgt_bytes))
    out_tr = np.asarray(out_tr)
    scaled = ref / (1.0 - p)
    ok = np.isclose(out_tr, 0.0, atol=1e-6) | np.isclose(out_tr, scaled,
                                                         rtol=1e-5, atol=1e-5)
    assert ok.all(), "dropout output elements must be 0 or ref/(1-p)"
    assert (out_tr == 0.0).any() and (out_tr != 0.0).any()

    print("KERNEL_OK")
</pallas_src>

<mosaic_0001>
module attributes {stable_mosaic.version = 11 : i64} {
  func.func @_pe_kernel(%arg0: i32, %arg1: memref<2x128xf32, #tpu.memory_space<vmem>>, %arg2: memref<1x128xf32, #tpu.memory_space<vmem>>, %arg3: memref<2x128xf32, #tpu.memory_space<vmem>>) attributes {dimension_semantics = [#tpu.dimension_semantics<parallel>], iteration_bounds = array<i64: 2>, scalar_prefetch = 0 : i64, scratch_operands = 0 : i64, tpu.core_type = #tpu.core_type<tc>, window_params = [{transform_indices = @transform_0, window_bounds = array<i64: 2, 128>}, {transform_indices = @transform_1, window_bounds = array<i64: 1, 128>}, {transform_indices = @transform_2, window_bounds = array<i64: 2, 128>}]} {
    %c0 = arith.constant 0 : index
    %c0_0 = arith.constant 0 : index
    %0 = vector.load %arg1[%c0, %c0_0] : memref<2x128xf32, #tpu.memory_space<vmem>>, vector<2x128xf32>
    %cst = arith.constant 5.65685415 : f32
    %1 = vector.broadcast %cst : f32 to vector<2x128xf32>
    %2 = arith.mulf %0, %1 : vector<2x128xf32>
    %c0_1 = arith.constant 0 : index
    %c0_2 = arith.constant 0 : index
    %3 = vector.load %arg2[%c0_1, %c0_2] : memref<1x128xf32, #tpu.memory_space<vmem>>, vector<1x128xf32>
    %4 = vector.broadcast %3 : vector<1x128xf32> to vector<2x128xf32>
    %5 = arith.addf %2, %4 : vector<2x128xf32>
    %c0_3 = arith.constant 0 : index
    %c0_4 = arith.constant 0 : index
    %6 = vector.load %arg3[%c0_3, %c0_4] : memref<2x128xf32, #tpu.memory_space<vmem>>, vector<2x128xf32>
    tpu.vector_store %arg3[%c0_3, %c0_4], %5 {strides = array<i32>} : memref<2x128xf32, #tpu.memory_space<vmem>>, vector<2x128xf32>,
    return
  }
  func.func @transform_0(%arg0: i32) -> (i32, i32) {
    %c0_i32 = arith.constant 0 : i32
    %c0_i32_0 = arith.constant 0 : i32
    return %c0_i32, %arg0 : i32, i32
  }
  func.func @transform_1(%arg0: i32) -> (i32, i32) {
    %c0_i32 = arith.constant 0 : i32
    %c0_i32_0 = arith.constant 0 : i32
    return %c0_i32, %arg0 : i32, i32
  }
  func.func @transform_2(%arg0: i32) -> (i32, i32) {
    %c0_i32 = arith.constant 0 : i32
    %c0_i32_0 = arith.constant 0 : i32
    return %c0_i32, %arg0 : i32, i32
  }
}

</mosaic_0001>

<llo_original>
// kernel: tpu_custom_call.1
$region0: #{tpu_custom_call.1}
  #allocation0 [shape = 'u32[]', space=smem, size = 0x4, offset = 0x4, fixed_abs, tag = 'smem constant byte address 0x4 - core index']
  #allocation1 [shape = 'u32[72,128]{1,0:T(1,128)}', space=vmem, size = 0x9000, scoped, tag = 'internal scratch']
  %s0 = inlined_call_operand.hbm [shape: f32[2,256], index: 0, kind: input, shape index: {}]
  %s1 = inlined_call_operand.hbm [shape: f32[1,256], index: 1, kind: input, shape index: {}]
  %s2 = inlined_call_operand.hbm [shape: f32[2,256], index: 2, kind: output, shape index: {}]
  %s3 = sld [smem:[#allocation0]]
  $region49: #{tpu_custom_call.1} parent=0
    _
  %s5 = ssub.s32 1, %s3
  %s6 = scalar_select 0, %s5, %s3
  $region1: #{tpu_custom_call.1} parent=0
    #allocation2 [shape = 'u8[2048]{0}', space=vmem, size = 0x800, scoped, tag = 'input window, operand 0']
    #allocation3 [shape = 's32[2]{0}', space=sflag, size = 0x8, scoped, tag = 'scoped memory for tpu_custom_call.1']
    #allocation4 [shape = 's32[2]{0}', space=sflag, size = 0x8, scoped, tag = 'scoped memory for tpu_custom_call.1']
    #allocation5 [shape = 'u8[1024]{0}', space=vmem, size = 0x400, scoped, tag = 'input window, operand 1']
    #allocation6 [shape = 's32[2]{0}', space=sflag, size = 0x8, scoped, tag = 'scoped memory for tpu_custom_call.1']
    #allocation7 [shape = 'u8[2048]{0}', space=vmem, size = 0x800, scoped, tag = 'output window, operand 0']
    %7 = vsyncpa [#allocation3], 0
    %s8 = scalar_lea.sflag [#allocation3], 1
    %9 = vsyncpa %s8, 0
    %10 = vsyncpa [#allocation6], 0
    %s11 = scalar_lea.sflag [#allocation6], 1
    %12 = vsyncpa %s11, 0
    %13 = vsyncpa [#allocation4], 0
    %s14 = scalar_lea.sflag [#allocation4], 1
    %15 = vsyncpa %s14, 0
    loop: start=0, step=1, limit=4
    $region2: #{tpu_custom_call.1} parent=1 // loop_pre_header
      _
    $region3: #{tpu_custom_call.1} parent=1 // loop_header
      %s17 = sphi 0, %s21
      %p18 = scmp.ge.s32.totalorder %s17, 4
      %s27 = sphi 0, %s29
      %s30 = sphi 0, %s27
      %s31 = sphi 0, %s30
      %s47 = sphi 0, %s31
      %s53 = sphi 0, %s55
      %s56 = sphi 0, %s53
      %s57 = sphi 0, %s56
      %s73 = sphi 0, %s57
      %s79 = sphi 0, %s81
      %s82 = sphi 0, %s79
      %s83 = sphi 0, %s82
      %s99 = sphi 0, %s83
    $region4: #{tpu_custom_call.1} parent=1 // loop_header_branch
      %20 = sbr.rel (%p18) target = $region8
    $region5: #{tpu_custom_call.1} parent=1 // loop_body
      %s22 = ssub.s32 %s17, 1
      %s23 = ssub.s32 %s17, 2
      %s24 = sadd.s32 %s17, 1
      %s25 = ssub.s32 %s17, %s24
      %p26 = scmp.eq.s32.totalorder %s25, 0
      %s28 = sadd.s32 %s27, 1
      %s29 = scalar_select %p26, %s27, %s28
      %p32 = pneg %p26
      %p33 = scmp.eq.s32.totalorder %s17, 1
      %p34 = por %p32, %p33
      %p35 = scmp.ne.s32.totalorder %s27, %s30
      %p36 = scmp.eq.s32.totalorder %s17, 0
      %p37 = por %p35, %p36
      %p38 = scmp.ne.s32.totalorder %s27, %s30
      %p39 = scmp.eq.s32.totalorder %s22, 1
      %p40 = por %p38, %p39
      %p41 = scmp.ne.s32.totalorder %s30, %s31
      %p42 = scmp.eq.s32.totalorder %s22, 0
      %p43 = por %p41, %p42
      %p44 = scmp.ne.s32.totalorder %s30, %s31
      %p45 = scmp.eq.s32.totalorder %s23, 1
      %p46 = por %p44, %p45
      %p48 = scmp.ne.s32.totalorder %s31, %s47
      %p49 = scmp.eq.s32.totalorder %s23, 0
      %p50 = por %p48, %p49
      %s51 = ssub.s32 %s17, %s24
      %p52 = scmp.eq.s32.totalorder %s51, 0
      %s54 = sadd.s32 %s53, 1
      %s55 = scalar_select %p52, %s53, %s54
      %p58 = pneg %p52
      %p59 = scmp.eq.s32.totalorder %s17, 1
      %p60 = por %p58, %p59
      %p61 = scmp.ne.s32.totalorder %s53, %s56
      %p62 = scmp.eq.s32.totalorder %s17, 0
      %p63 = por %p61, %p62
      %p64 = scmp.ne.s32.totalorder %s53, %s56
      %p65 = scmp.eq.s32.totalorder %s22, 1
      %p66 = por %p64, %p65
      %p67 = scmp.ne.s32.totalorder %s56, %s57
      %p68 = scmp.eq.s32.totalorder %s22, 0
      %p69 = por %p67, %p68
      %p70 = scmp.ne.s32.totalorder %s56, %s57
      %p71 = scmp.eq.s32.totalorder %s23, 1
      %p72 = por %p70, %p71
      %p74 = scmp.ne.s32.totalorder %s57, %s73
      %p75 = scmp.eq.s32.totalorder %s23, 0
      %p76 = por %p74, %p75
      %s77 = ssub.s32 %s17, %s24
      %p78 = scmp.eq.s32.totalorder %s77, 0
      %s80 = sadd.s32 %s79, 1
      %s81 = scalar_select %p78, %s79, %s80
      %p84 = pneg %p78
      %p85 = scmp.eq.s32.totalorder %s17, 1
      %p86 = por %p84, %p85
      %p87 = scmp.ne.s32.totalorder %s79, %s82
      %p88 = scmp.eq.s32.totalorder %s17, 0
      %p89 = por %p87, %p88
      %p90 = scmp.ne.s32.totalorder %s79, %s82
      %p91 = scmp.eq.s32.totalorder %s22, 1
      %p92 = por %p90, %p91
      %p93 = scmp.ne.s32.totalorder %s82, %s83
      %p94 = scmp.eq.s32.totalorder %s22, 0
      %p95 = por %p93, %p94
      %p96 = scmp.ne.s32.totalorder %s82, %s83
      %p97 = scmp.eq.s32.totalorder %s23, 1
      %p98 = por %p96, %p97
      %p100 = scmp.ne.s32.totalorder %s83, %s99
      %p101 = scmp.eq.s32.totalorder %s23, 0
      %p102 = por %p100, %p101
      %p103 = scmp.le.s32.totalorder 1, %s17
      %p104 = scmp.lt.s32.totalorder %s17, 3
      %p105 = pnand %p103, %p104
      %p106 = pneg %p105
      // Predicated region
      $region9: #{tpu_custom_call.1} parent=5 // pred_check
        _
      $region10: #{tpu_custom_call.1} parent=5 // pred_check_branch
        %108 = sbr.rel (%p105) target = $region12
      $region11: #{tpu_custom_call.1} parent=5 // pred_region
        %s109 = ssub.s32 %s17, 1
      $region12: #{tpu_custom_call.1} parent=5 // pred_fallthru
        _
      %p110 = scmp.lt.s32.totalorder %s17, 2
      // Predicated region
      $region13: #{tpu_custom_call.1} parent=5 // pred_check
        %p111 = pneg %p110
      $region14: #{tpu_custom_call.1} parent=5 // pred_check_branch
        %113 = sbr.rel (%p111) target = $region16
      $region15: #{tpu_custom_call.1} parent=5 // pred_region
        // Predicated region
        $region17: #{tpu_custom_call.1} parent=15 // pred_check
          %p114 = pneg %p37
        $region18: #{tpu_custom_call.1} parent=15 // pred_check_branch
          %116 = sbr.rel (%p114) target = $region20
        $region19: #{tpu_custom_call.1} parent=15 // pred_region
          %s117 = sand.u32 %s27, 1
          %s118 = scalar_lea.sflag [#allocation3], %s117
          %s119 = sand.u32 %s27, 1
          %s120 = smul.addr %s119, 2
          %s121 = scalar_lea.vmem [#allocation2], %s120
          %123 = vsyncadd %s118, 0
          %s124 = smul.addr %s17, 2
          %s125 = scalar_lea.hbm %s0, %s124
          %s127 = sshll.u32 %s125, 4
          %s128 = int_to_ptr.hbm [resolvable:$true] %s127
          %s129 = sshll.u32 %s121, 4
          %s130 = int_to_ptr.vmem [resolvable:$true] %s129
          %132 = dma.hbm_to_vmem [thread:$0]  %s128, 32, %s130, %s118
        $region20: #{tpu_custom_call.1} parent=15 // pred_fallthru
          _
        // Predicated region
        $region21: #{tpu_custom_call.1} parent=15 // pred_check
          %p133 = pneg %p63
        $region22: #{tpu_custom_call.1} parent=15 // pred_check_branch
          %135 = sbr.rel (%p133) target = $region24
        $region23: #{tpu_custom_call.1} parent=15 // pred_region
          %s136 = sand.u32 %s53, 1
          %s137 = scalar_lea.sflag [#allocation6], %s136
          %s138 = sand.u32 %s53, 1
          %s139 = scalar_lea.vmem [#allocation5], %s138
          %141 = vsyncadd %s137, 0
          %s142 = scalar_lea.hbm %s1, %s17
          %s144 = sshll.u32 %s142, 4
          %s145 = int_to_ptr.hbm [resolvable:$true] %s144
          %s146 = sshll.u32 %s139, 4
          %s147 = int_to_ptr.vmem [resolvable:$true] %s146
          %149 = dma.hbm_to_vmem [thread:$0]  %s145, 16, %s147, %s137
        $region24: #{tpu_custom_call.1} parent=15 // pred_fallthru
          _
      $region16: #{tpu_custom_call.1} parent=5 // pred_fallthru
        _
      %p150 = scmp.le.s32.totalorder 1, %s17
      %p151 = scmp.lt.s32.totalorder %s17, 3
      %p152 = pnand %p150, %p151
      %p153 = pneg %p152
      // Predicated region
      $region25: #{tpu_custom_call.1} parent=5 // pred_check
        _
      $region26: #{tpu_custom_call.1} parent=5 // pred_check_branch
        %155 = sbr.rel (%p152) target = $region28
      $region27: #{tpu_custom_call.1} parent=5 // pred_region
        %s156 = ssub.s32 %s17, 1
        %s157 = sand.u32 %s30, 1
        %s158 = scalar_lea.sflag [#allocation3], %s157
        %s159 = sand.u32 %s30, 1
        %s160 = smul.addr %s159, 2
        %s161 = scalar_lea.vmem [#allocation2], %s160
        // Predicated region
        $region29: #{tpu_custom_call.1} parent=27 // pred_check
          %p162 = pneg %p43
        $region30: #{tpu_custom_call.1} parent=27 // pred_check_branch
          %164 = sbr.rel (%p162) target = $region32
        $region31: #{tpu_custom_call.1} parent=27 // pred_region
          %166 = dma.done %s158, 32
        $region32: #{tpu_custom_call.1} parent=27 // pred_fallthru
          _
        %s167 = sand.u32 %s56, 1
        %s168 = scalar_lea.sflag [#allocation6], %s167
        %s169 = sand.u32 %s56, 1
        %s170 = scalar_lea.vmem [#allocation5], %s169
        // Predicated region
        $region33: #{tpu_custom_call.1} parent=27 // pred_check
          %p171 = pneg %p69
        $region34: #{tpu_custom_call.1} parent=27 // pred_check_branch
          %173 = sbr.rel (%p171) target = $region36
        $region35: #{tpu_custom_call.1} parent=27 // pred_region
          %175 = dma.done %s168, 16
        $region36: #{tpu_custom_call.1} parent=27 // pred_fallthru
          _
        %s176 = sand.u32 %s30, 1
        %s177 = scalar_lea.sflag [#allocation3], %s176
        %s178 = sand.u32 %s30, 1
        %s179 = smul.addr %s178, 2
        %s180 = scalar_lea.vmem [#allocation2], %s179
        %p181 = pneg %p43
        %p182 = pneg %p40
        %s183 = sand.u32 %s56, 1
        %s184 = scalar_lea.sflag [#allocation6], %s183
        %s185 = sand.u32 %s56, 1
        %s186 = scalar_lea.vmem [#allocation5], %s185
        %p187 = pneg %p69
        %p188 = pneg %p66
        %p189 = pneg %p95
        %p190 = pneg %p92
        %s191 = sand.u32 %s82, 1
        %s192 = scalar_lea.sflag [#allocation4], %s191
        %s193 = sand.u32 %s82, 1
        %s194 = smul.addr %s193, 2
        %s195 = scalar_lea.vmem [#allocation7], %s194
        %v196 = vld [vmem:[%s161] sm:$0x3]
        %v197 = vmul.f32 %v196, 5.656854
        %v198 = vld [vmem:[%s170] sm:$0x1]
        %v200 = vperm.slane %v198, 0
        %v202 = vadd.f32 %v197, %v200
        %203 = vst [vmem:[%s195] sm:$0x3] %v202
        %s204 = sand.u32 %s82, 1
        %s205 = scalar_lea.sflag [#allocation4], %s204
        %s206 = sand.u32 %s82, 1
        %s207 = smul.addr %s206, 2
        %s208 = scalar_lea.vmem [#allocation7], %s207
        // Predicated region
        $region37: #{tpu_custom_call.1} parent=27 // pred_check
          %p209 = pneg %p92
        $region38: #{tpu_custom_call.1} parent=27 // pred_check_branch
          %211 = sbr.rel (%p209) target = $region40
        $region39: #{tpu_custom_call.1} parent=27 // pred_region
          %213 = vsyncadd %s205, 0
          %s214 = smul.addr %s22, 2
          %s215 = scalar_lea.hbm %s2, %s214
          %s217 = sshll.u32 %s208, 4
          %s218 = int_to_ptr.vmem [resolvable:$true] %s217
          %s219 = sshll.u32 %s215, 4
          %s220 = int_to_ptr.hbm [resolvable:$true] %s219
          %222 = dma.vmem_to_hbm [thread:$0]  %s218, 32, %s220, %s205
        $region40: #{tpu_custom_call.1} parent=27 // pred_fallthru
          _
      $region28: #{tpu_custom_call.1} parent=5 // pred_fallthru
        _
      %p223 = scmp.le.s32.totalorder 2, %s17
      // Predicated region
      $region41: #{tpu_custom_call.1} parent=5 // pred_check
        %p224 = pneg %p223
      $region42: #{tpu_custom_call.1} parent=5 // pred_check_branch
        %226 = sbr.rel (%p224) target = $region44
      $region43: #{tpu_custom_call.1} parent=5 // pred_region
        %s227 = ssub.s32 %s17, 2
        // Predicated region
        $region45: #{tpu_custom_call.1} parent=43 // pred_check
          %p228 = pneg %p98
        $region46: #{tpu_custom_call.1} parent=43 // pred_check_branch
          %230 = sbr.rel (%p228) target = $region48
        $region47: #{tpu_custom_call.1} parent=43 // pred_region
          %s231 = sand.u32 %s83, 1
          %s232 = scalar_lea.sflag [#allocation4], %s231
          %s233 = sand.u32 %s83, 1
          %s234 = smul.addr %s233, 2
          %s235 = scalar_lea.vmem [#allocation7], %s234
          %237 = dma.done %s232, 32
        $region48: #{tpu_custom_call.1} parent=43 // pred_fallthru
          _
      $region44: #{tpu_custom_call.1} parent=5 // pred_fallthru
        _
    $region6: #{tpu_custom_call.1} parent=1 // loop_footer
      %s21 = sadd.s32 1, %s17
    $region7: #{tpu_custom_call.1} parent=1 // loop_footer_branch
      %16 = sbr.rel target = $region3
    $region8: #{tpu_custom_call.1} parent=1 // loop_exit
      _
    %238 = vsyncpa [#allocation3], 1
    %s239 = scalar_lea.sflag [#allocation3], 1
    %240 = vsyncpa %s239, 1
    %241 = vsyncpa [#allocation6], 1
    %s242 = scalar_lea.sflag [#allocation6], 1
    %243 = vsyncpa %s242, 1
    %244 = vsyncpa [#allocation4], 1
    %s245 = scalar_lea.sflag [#allocation4], 1
    %246 = vsyncpa %s245, 1

</llo_original>
